<compile_context>
chip_gen: v6e
topology: v6e:2x2x1
jax: 0.10.0
libtpu: 0.0.40
codegen_flags: <defaults>
</compile_context>

<pallas_src>
import functools

import jax
import jax.numpy as jnp
import numpy as np
from jax.experimental import pallas as pl
from jax.experimental.pallas import tpu as pltpu


def _cdiv(a, b):
    return -(-a // b)


def _round_up(x, m):
    return ((x + m - 1) // m) * m


def _round_down_mult(x, m):
    return max(m, (x // m) * m)


def _vmem_limit(need_bytes):
    # >= 32 MiB (don't let v5e's 16 MiB scoped default shrink the pipeline),
    # <= 48 MiB (stay well under v7x's 64 MiB physical VMEM).
    return int(min(max(2 * need_bytes, 32 << 20), 48 << 20))


# ----------------------------------------------------------------------------
# Kernels
# ----------------------------------------------------------------------------
def _vera_rows_kernel(x_ref, a_ref, b_ref, y_ref):
    """y = (x @ a_eff) @ b_eff   (diag scales + `scaling` folded into factors)."""
    u = jnp.dot(x_ref[...], a_ref[...], preferred_element_type=jnp.float32)   # (TM, R)
    u = u.astype(b_ref.dtype)
    y_ref[...] = jnp.dot(u, b_ref[...],
                         preferred_element_type=jnp.float32).astype(y_ref.dtype)


def _vera_rows_gated_kernel(gate_ref, x_ref, a_ref, b_ref, y_ref):
    """Gated variant over a (batch, seq-tile) grid.

    gate_ref: (B,) float32 resident in SMEM; the per-batch gate scalar is
    applied to the rank-R intermediate (TM*R elements) instead of the
    (TM, OUT) result.  NOTE: the gated path intentionally omits `scaling`
    (matches the PyTorch forward).
    """
    b = pl.program_id(0)
    g = gate_ref[b]                                                       # SMEM scalar
    u = jnp.dot(x_ref[0], a_ref[...], preferred_element_type=jnp.float32)  # (TS, R)
    u = (u * g).astype(b_ref.dtype)
    y_ref[0] = jnp.dot(u, b_ref[...],
                       preferred_element_type=jnp.float32).astype(y_ref.dtype)


def _gate_kernel(li_ref, gw_ref, gb_ref, gate_ref, acc_ref, *, seq_len, seq_tile):
    """Per-batch gate: mean over S of sigmoid(layer_input @ gate_w.T + gate_b).

    H == 1, so the "matmul" is a VPU broadcast-multiply + lane reduction; the
    sum over sequence tiles is accumulated in a VMEM scratch and finalized on
    the last tile.  Rows >= seq_len (edge blocks) are masked, so no wrapper
    padding of layer_input is needed.
    """
    s_idx = pl.program_id(1)

    @pl.when(s_idx == 0)
    def _():
        acc_ref[...] = jnp.zeros_like(acc_ref)

    li = li_ref[0].astype(jnp.float32)                                        # (TS, IN)
    logits = jnp.sum(li * gw_ref[...], axis=-1, keepdims=True) + gb_ref[...]  # (TS, 1)
    g = jax.nn.sigmoid(logits)
    row = s_idx * seq_tile + jax.lax.broadcasted_iota(jnp.int32, g.shape, 0)
    g = jnp.where(row < seq_len, g, 0.0)
    acc_ref[...] += jnp.sum(g)

    @pl.when(s_idx == pl.num_programs(1) - 1)
    def _():
        gate_ref[0] = (acc_ref[...] * (1.0 / seq_len)).astype(gate_ref.dtype)


# ----------------------------------------------------------------------------
# Wrappers
# ----------------------------------------------------------------------------
def _compute_gate(layer_input, gate_w, gate_b, *, seq_tile_cap=512,
                  vmem_budget_bytes=16 << 20):
    """Returns the per-batch gate, shape (B, 1, 1) float32."""
    B, S, IN = layer_input.shape
    H = gate_w.shape[0]
    assert H == 1, "Pallas Vera kernel supports gating_heads == 1 only"
    # TODO(synk): generalize to H > 1 (requires (B, H, 1) broadcast handling).

    isz = jnp.dtype(layer_input.dtype).itemsize
    # VMEM-budget-aware sequence tile (the (1, TS, IN) block is double-buffered).
    ts_budget = _round_down_mult(max(vmem_budget_bytes // (2 * IN * isz), 8), 8)
    cap = min(seq_tile_cap, ts_budget)
    TS = S if S <= cap else cap

    gw = gate_w.reshape(1, IN).astype(jnp.float32)
    gb = gate_b.reshape(1, 1).astype(jnp.float32)

    vmem_need = 2 * TS * IN * isz + 2 * (IN + 1) * 4
    cparams = pltpu.CompilerParams(
        dimension_semantics=("parallel", "arbitrary"),
        vmem_limit_bytes=_vmem_limit(vmem_need))

    kernel = functools.partial(_gate_kernel, seq_len=S, seq_tile=TS)
    gate = pl.pallas_call(
        kernel,
        out_shape=jax.ShapeDtypeStruct((B, 1, 1), jnp.float32),
        grid=(B, _cdiv(S, TS)),
        in_specs=[
            pl.BlockSpec((1, TS, IN), lambda b, s: (b, s, 0)),   # layer_input tile
            pl.BlockSpec((1, IN), lambda b, s: (0, 0)),          # gate weight row
            pl.BlockSpec((1, 1), lambda b, s: (0, 0)),           # gate bias
        ],
        out_specs=pl.BlockSpec((1, 1, 1), lambda b, s: (b, 0, 0)),
        scratch_shapes=[pltpu.VMEM((1, 1), jnp.float32)],
        compiler_params=cparams,
    )(layer_input, gw, gb)
    return gate                                                   # (B, 1, 1)


def vera_forward(hidden_states, layer_input, params, *, scaling, use_gating,
                 row_tile_cap=512, compute_dtype=None,
                 vmem_budget_bytes=32 << 20):
    """Pallas implementation of Vera.forward.

    hidden_states, layer_input: (B, S, IN)
    params: lora_A (R, IN), lora_B (OUT, R), vera_D (R, R diag), vera_B
            (OUT, OUT diag); if use_gating: gate_w (1, IN), gate_b (1,)
    Returns (out (B, S, OUT), gate (B, 1, 1) or None) — same as PyTorch.

    compute_dtype=None uses the activations' dtype (no extra wrapper cast
    pass).  In a bf16 pipeline, pass bf16 activations to halve the HBM bytes
    of this bandwidth-bound op; MXU accumulation stays f32 (note: bf16
    operands add rounding to the rank-R intermediate; tolerance vs an f32
    reference is correspondingly looser).
    """
    if hidden_states is None:
        hidden_states = layer_input
    # TODO(synk): config.dropout == 0.0 here, so lora_dropout is identity.

    B, S, IN = hidden_states.shape
    lora_A = params["lora_A"]                       # (R, IN)
    lora_B = params["lora_B"]                       # (OUT, R)
    d_vec = jnp.diagonal(params["vera_D"])          # (R,)   — diagonal contract
    b_vec = jnp.diagonal(params["vera_B"])          # (OUT,) — diagonal contract
    R = lora_A.shape[0]
    OUT = lora_B.shape[0]

    out_dtype = hidden_states.dtype
    if compute_dtype is None:
        compute_dtype = hidden_states.dtype

    # Factored form of x @ delta_w.T, pre-transposed to MXU-native layouts:
    #   x @ delta_w.T == (x @ (diag(d) @ lora_A).T) @ (diag(b) @ lora_B).T
    a_eff = (lora_A * d_vec[:, None]).T             # (IN, R)
    b_eff = (lora_B * b_vec[:, None]).T             # (R, OUT)
    if not use_gating:
        b_eff = b_eff * jnp.asarray(scaling, b_eff.dtype)   # fold scalar once

    # Lane-dense output: pad a narrow OUT (< 128) up to 128 lanes in the tiny
    # factor so the output stores are unmasked vst (wide non-multiples keep
    # the full dim, which is a legal block shape).
    OUT_p = 128 if OUT < 128 else OUT
    if OUT_p != OUT:
        b_eff = jnp.pad(b_eff, ((0, 0), (0, OUT_p - OUT)))
    a_eff = a_eff.astype(compute_dtype)
    b_eff = b_eff.astype(compute_dtype)

    x_isz = jnp.dtype(compute_dtype).itemsize
    o_isz = jnp.dtype(out_dtype).itemsize
    per_row_bytes = IN * x_isz + OUT_p * o_isz
    factors_bytes = 2 * (IN * R + R * OUT_p) * x_isz
    # VMEM-budget-aware row tile (x and y tiles are double-buffered by Pallas).
    avail = max(vmem_budget_bytes - factors_bytes, 2 * 8 * per_row_bytes)
    tm_budget = _round_down_mult(avail // (2 * per_row_bytes), 8)

    # ------------------------------------------------------------------ ungated
    if not use_gating:
        M = B * S
        TM = min(row_tile_cap, tm_budget, _round_up(M, 8))
        # Keep >= 2 grid steps so v7x's two TensorCores both get work.
        while _cdiv(M, TM) < 2 and TM > 8:
            TM = _round_up(TM // 2, 8)
        grid = (_cdiv(M, TM),)

        x2d = hidden_states.reshape(M, IN)          # free (row-major) reshape
        if x2d.dtype != compute_dtype:
            x2d = x2d.astype(compute_dtype)

        vmem_need = 2 * TM * per_row_bytes + factors_bytes
        cparams = pltpu.CompilerParams(
            dimension_semantics=("parallel",),
            vmem_limit_bytes=_vmem_limit(vmem_need))
        cost = pl.CostEstimate(
            flops=int(2 * M * R * (IN + OUT_p)),
            transcendentals=0,
            bytes_accessed=int(M * per_row_bytes + factors_bytes))

        y = pl.pallas_call(
            _vera_rows_kernel,
            out_shape=jax.ShapeDtypeStruct((M, OUT_p), out_dtype),
            grid=grid,
            in_specs=[
                pl.BlockSpec((TM, IN), lambda i: (i, 0)),    # x row tile
                pl.BlockSpec((IN, R), lambda i: (0, 0)),     # a_eff (VMEM-resident)
                pl.BlockSpec((R, OUT_p), lambda i: (0, 0)),  # b_eff (VMEM-resident)
            ],
            out_specs=pl.BlockSpec((TM, OUT_p), lambda i: (i, 0)),
            compiler_params=cparams,
            cost_estimate=cost,
        )(x2d, a_eff, b_eff)
        if OUT_p != OUT:
            y = y[:, :OUT]
        return y.reshape(B, S, OUT), None

    # ------------------------------------------------------------------- gated
    # Gate is a full-sequence reduction -> compute it first (cheap VPU kernel),
    # then apply it as a per-batch SMEM scalar inside the row-tiled kernel.
    gate = _compute_gate(layer_input, params["gate_w"], params["gate_b"])   # (B,1,1)
    gate_flat = gate.reshape(B).astype(jnp.float32)                          # -> SMEM

    TS = min(row_tile_cap, tm_budget)
    TS = S if S <= TS else TS
    while B * _cdiv(S, TS) < 2 and TS > 8:
        TS = _round_up(TS // 2, 8)
    grid = (B, _cdiv(S, TS))

    x3 = hidden_states
    if x3.dtype != compute_dtype:
        x3 = x3.astype(compute_dtype)

    vmem_need = 2 * TS * per_row_bytes + factors_bytes
    cparams = pltpu.CompilerParams(
        dimension_semantics=("parallel", "parallel"),
        vmem_limit_bytes=_vmem_limit(vmem_need))
    cost = pl.CostEstimate(
        flops=int(2 * B * S * R * (IN + OUT_p)),
        transcendentals=0,
        bytes_accessed=int(B * S * per_row_bytes + factors_bytes))

    y = pl.pallas_call(
        _vera_rows_gated_kernel,
        out_shape=jax.ShapeDtypeStruct((B, S, OUT_p), out_dtype),
        grid=grid,
        in_specs=[
            pl.BlockSpec(memory_space=pltpu.MemorySpace.SMEM),      # gate (B,) scalars
            pl.BlockSpec((1, TS, IN), lambda b, s: (b, s, 0)),      # x tile
            pl.BlockSpec((IN, R), lambda b, s: (0, 0)),             # a_eff
            pl.BlockSpec((R, OUT_p), lambda b, s: (0, 0)),          # b_eff
        ],
        out_specs=pl.BlockSpec((1, TS, OUT_p), lambda b, s: (b, s, 0)),
        compiler_params=cparams,
        cost_estimate=cost,
    )(gate_flat, x3, a_eff, b_eff)
    if OUT_p != OUT:
        y = y[..., :OUT]
    return y, gate                                   # gate: (B, 1, 1) as in torch


# ----------------------------------------------------------------------------
# Pure-JAX reference (mirrors the PyTorch forward exactly, f32 math)
# ----------------------------------------------------------------------------
def vera_reference(hidden_states, layer_input, params, *, scaling, use_gating):
    delta_w = params["vera_B"] @ params["lora_B"] @ params["vera_D"] @ params["lora_A"]
    h = hidden_states.astype(jnp.float32) @ delta_w.T
    if use_gating:
        gate = jax.nn.sigmoid(layer_input.astype(jnp.float32) @ params["gate_w"].T
                              + params["gate_b"])
        gate = jnp.mean(gate, axis=1)[..., None]      # (B, H, 1)
        return h * gate, gate
    return h * scaling, None


# ----------------------------------------------------------------------------
# Main
# ----------------------------------------------------------------------------
if __name__ == "__main__":
    R = 8           # config.r
    ALPHA = 8.0     # config.alpha
    VERA_D_INIT = 0.1
    VERA_B_INIT = 0.5
    SCALING = ALPHA / R
    GATING_HEADS = 1

    def make_case(key, B, S, IN, OUT, dtype):
        k_a, k_b, k_x, k_li, k_gw, k_gb = jax.random.split(key, 6)
        params = {
            "lora_A": jax.random.normal(k_a, (R, IN), jnp.float32) * 0.02,
            "lora_B": jax.random.normal(k_b, (OUT, R), jnp.float32) * 0.02,
            "vera_D": jnp.diag(jnp.ones((R,), jnp.float32) * VERA_D_INIT),
            "vera_B": jnp.diag(jnp.ones((OUT,), jnp.float32) * VERA_B_INIT),
            "gate_w": jax.random.normal(k_gw, (GATING_HEADS, IN), jnp.float32) * 0.02,
            "gate_b": jax.random.normal(k_gb, (GATING_HEADS,), jnp.float32) * 0.02,
        }
        hs = jax.random.normal(k_x, (B, S, IN), jnp.float32).astype(dtype)
        li = jax.random.normal(k_li, (B, S, IN), jnp.float32).astype(dtype)
        return params, hs, li

    cases = [
        # (B, S,  IN, OUT, dtype,        rtol, atol)
        (2, 8,  32, 32, jnp.float32,  1e-5, 1e-5),   # aligned rows, lane-padded OUT
        (2, 12, 48, 40, jnp.float32,  1e-5, 1e-5),   # non-8-multiple rows -> edge blocks
        (2, 8,  32, 32, jnp.bfloat16, 5e-2, 2e-3),   # bf16 operands, f32 accumulation
    ]

    key = jax.random.PRNGKey(0)
    ok = True
    for idx, (B, S, IN, OUT, dtype, rtol, atol) in enumerate(cases):
        key, sub = jax.random.split(key)
        params, hs, li = make_case(sub, B, S, IN, OUT, dtype)
        for use_gating in (False, True):
            out, gate = vera_forward(hs, li, params, scaling=SCALING,
                                     use_gating=use_gating)
            out = jax.block_until_ready(out)
            ref_out, ref_gate = vera_reference(hs, li, params, scaling=SCALING,
                                               use_gating=use_gating)
            good = bool(np.allclose(np.asarray(out, dtype=np.float32),
                                    np.asarray(ref_out, dtype=np.float32),
                                    rtol=rtol, atol=atol))
            if use_gating:
                gate = jax.block_until_ready(gate)
                good &= bool(np.allclose(np.asarray(gate, dtype=np.float32),
                                         np.asarray(ref_gate, dtype=np.float32),
                                         rtol=rtol, atol=max(atol, 1e-5)))
            if not good:
                print(f"MISMATCH case={idx} gating={use_gating}")
            ok &= good

    print("KERNEL_OK" if ok else "KERNEL_MISMATCH")
</pallas_src>

<mosaic_0001>
module attributes {stable_mosaic.version = 11 : i64} {
  func.func @_vera_rows_kernel(%arg0: i32, %arg1: memref<8x32xf32, #tpu.memory_space<vmem>>, %arg2: memref<32x8xf32, #tpu.memory_space<vmem>>, %arg3: memref<8x128xf32, #tpu.memory_space<vmem>>, %arg4: memref<8x128xf32, #tpu.memory_space<vmem>>) attributes {dimension_semantics = [#tpu.dimension_semantics<parallel>], iteration_bounds = array<i64: 2>, scalar_prefetch = 0 : i64, scratch_operands = 0 : i64, tpu.core_type = #tpu.core_type<tc>, window_params = [{transform_indices = @transform_0, window_bounds = array<i64: 8, 32>}, {pipeline_mode = #tpu.pipeline_mode<synchronous>, transform_indices = @transform_1, window_bounds = array<i64: 32, 8>}, {pipeline_mode = #tpu.pipeline_mode<synchronous>, transform_indices = @transform_2, window_bounds = array<i64: 8, 128>}, {transform_indices = @transform_3, window_bounds = array<i64: 8, 128>}]} {
    %c0 = arith.constant 0 : index
    %c0_0 = arith.constant 0 : index
    %0 = vector.load %arg1[%c0, %c0_0] : memref<8x32xf32, #tpu.memory_space<vmem>>, vector<8x32xf32>
    %c0_1 = arith.constant 0 : index
    %c0_2 = arith.constant 0 : index
    %1 = vector.load %arg2[%c0_1, %c0_2] : memref<32x8xf32, #tpu.memory_space<vmem>>, vector<32x8xf32>
    %cst = arith.constant dense<0.000000e+00> : vector<8x8xf32>
    %2 = tpu.matmul %0, %1, %cst {dimension_numbers = #tpu.dot_dimension_numbers<[1], [0], [0], [1], [0, 0, 1, 1], [], []>} : vector<8x32xf32>, vector<32x8xf32>, vector<8x8xf32> -> vector<8x8xf32>
    %c0_3 = arith.constant 0 : index
    %c0_4 = arith.constant 0 : index
    %3 = vector.load %arg3[%c0_3, %c0_4] : memref<8x128xf32, #tpu.memory_space<vmem>>, vector<8x128xf32>
    %cst_5 = arith.constant dense<0.000000e+00> : vector<8x128xf32>
    %4 = tpu.matmul %2, %3, %cst_5 {dimension_numbers = #tpu.dot_dimension_numbers<[1], [0], [0], [1], [0, 0, 1, 1], [], []>} : vector<8x8xf32>, vector<8x128xf32>, vector<8x128xf32> -> vector<8x128xf32>
    %c0_6 = arith.constant 0 : index
    %c0_7 = arith.constant 0 : index
    %5 = vector.load %arg4[%c0_6, %c0_7] : memref<8x128xf32, #tpu.memory_space<vmem>>, vector<8x128xf32>
    tpu.vector_store %arg4[%c0_6, %c0_7], %4 {strides = array<i32>} : memref<8x128xf32, #tpu.memory_space<vmem>>, vector<8x128xf32>,
    return
  }
  func.func @transform_0(%arg0: i32) -> (i32, i32) {
    %c0_i32 = arith.constant 0 : i32
    %c0_i32_0 = arith.constant 0 : i32
    return %arg0, %c0_i32 : i32, i32
  }
  func.func @transform_1(%arg0: i32) -> (i32, i32) {
    %c0_i32 = arith.constant 0 : i32
    %c0_i32_0 = arith.constant 0 : i32
    %c0_i32_1 = arith.constant 0 : i32
    return %c0_i32, %c0_i32_0 : i32, i32
  }
  func.func @transform_2(%arg0: i32) -> (i32, i32) {
    %c0_i32 = arith.constant 0 : i32
    %c0_i32_0 = arith.constant 0 : i32
    %c0_i32_1 = arith.constant 0 : i32
    return %c0_i32, %c0_i32_0 : i32, i32
  }
  func.func @transform_3(%arg0: i32) -> (i32, i32) {
    %c0_i32 = arith.constant 0 : i32
    %c0_i32_0 = arith.constant 0 : i32
    return %arg0, %c0_i32 : i32, i32
  }
}

</mosaic_0001>

<llo_original>
// kernel: tpu_custom_call.1
$region0: #{tpu_custom_call.1}
  #allocation0 [shape = 'u32[]', space=smem, size = 0x4, offset = 0x4, fixed_abs, tag = 'smem constant byte address 0x4 - core index']
  #allocation1 [shape = 'u32[144,128]{1,0:T(1,128)}', space=vmem, size = 0x12000, scoped, tag = 'internal scratch']
  %s0 = inlined_call_operand.vmem [shape: f32[16,32], index: 0, kind: input, shape index: {}]
  %s1 = inlined_call_operand.vmem [shape: f32[32,8], index: 1, kind: input, shape index: {}]
  %s2 = inlined_call_operand.vmem [shape: f32[8,128], index: 2, kind: input, shape index: {}]
  %s3 = inlined_call_operand.hbm [shape: f32[16,128], index: 3, kind: output, shape index: {}]
  %s4 = sld [smem:[#allocation0]]
  $region45: #{tpu_custom_call.1} parent=0
    _
  %s6 = ssub.s32 1, %s4
  %s7 = scalar_select 0, %s6, %s4
  $region1: #{tpu_custom_call.1} parent=0
    #allocation2 [shape = 'u8[8192]{0}', space=vmem, size = 0x2000, scoped, tag = 'output window, operand 0']
    #allocation3 [shape = 's32[2]{0}', space=sflag, size = 0x8, scoped, tag = 'scoped memory for tpu_custom_call.1']
    %8 = vsyncpa [#allocation3], 0
    %s9 = scalar_lea.sflag [#allocation3], 1
    %10 = vsyncpa %s9, 0
    loop: start=0, step=1, limit=4
    $region2: #{tpu_custom_call.1} parent=1 // loop_pre_header
      _
    $region3: #{tpu_custom_call.1} parent=1 // loop_header
      %s12 = sphi 0, %s16
      %p13 = scmp.ge.s32.totalorder %s12, 4
      %s22 = sphi 0, %s24
      %s25 = sphi 0, %s22
      %s26 = sphi 0, %s25
      %s42 = sphi 0, %s26
      %s46 = sphi 0, %s46
      %s48 = sphi 0, %s46
      %s49 = sphi 0, %s48
      %s63 = sphi 0, %s49
      %s67 = sphi 0, %s67
      %s69 = sphi 0, %s67
      %s70 = sphi 0, %s69
      %s84 = sphi 0, %s70
      %s90 = sphi 0, %s92
      %s93 = sphi 0, %s90
      %s94 = sphi 0, %s93
      %s110 = sphi 0, %s94
    $region4: #{tpu_custom_call.1} parent=1 // loop_header_branch
      %15 = sbr.rel (%p13) target = $region8
    $region5: #{tpu_custom_call.1} parent=1 // loop_body
      %s17 = ssub.s32 %s12, 1
      %s18 = ssub.s32 %s12, 2
      %s19 = sadd.s32 %s12, 1
      %s20 = ssub.s32 %s12, %s19
      %p21 = scmp.eq.s32.totalorder %s20, 0
      %s23 = sadd.s32 %s22, 1
      %s24 = scalar_select %p21, %s22, %s23
      %p27 = pneg %p21
      %p28 = scmp.eq.s32.totalorder %s12, 1
      %p29 = por %p27, %p28
      %p30 = scmp.ne.s32.totalorder %s22, %s25
      %p31 = scmp.eq.s32.totalorder %s12, 0
      %p32 = por %p30, %p31
      %p33 = scmp.ne.s32.totalorder %s22, %s25
      %p34 = scmp.eq.s32.totalorder %s17, 1
      %p35 = por %p33, %p34
      %p36 = scmp.ne.s32.totalorder %s25, %s26
      %p37 = scmp.eq.s32.totalorder %s17, 0
      %p38 = por %p36, %p37
      %p39 = scmp.ne.s32.totalorder %s25, %s26
      %p40 = scmp.eq.s32.totalorder %s18, 1
      %p41 = por %p39, %p40
      %p43 = scmp.ne.s32.totalorder %s26, %s42
      %p44 = scmp.eq.s32.totalorder %s18, 0
      %p45 = por %p43, %p44
      %s47 = sadd.s32 %s46, 1
      %p50 = scmp.eq.s32.totalorder %s12, 1
      %p51 = scmp.ne.s32.totalorder %s46, %s48
      %p52 = scmp.eq.s32.totalorder %s12, 0
      %p53 = por %p51, %p52
      %p54 = scmp.ne.s32.totalorder %s46, %s48
      %p55 = scmp.eq.s32.totalorder %s17, 1
      %p56 = por %p54, %p55
      %p57 = scmp.ne.s32.totalorder %s48, %s49
      %p58 = scmp.eq.s32.totalorder %s17, 0
      %p59 = por %p57, %p58
      %p60 = scmp.ne.s32.totalorder %s48, %s49
      %p61 = scmp.eq.s32.totalorder %s18, 1
      %p62 = por %p60, %p61
      %p64 = scmp.ne.s32.totalorder %s49, %s63
      %p65 = scmp.eq.s32.totalorder %s18, 0
      %p66 = por %p64, %p65
      %s68 = sadd.s32 %s67, 1
      %p71 = scmp.eq.s32.totalorder %s12, 1
      %p72 = scmp.ne.s32.totalorder %s67, %s69
      %p73 = scmp.eq.s32.totalorder %s12, 0
      %p74 = por %p72, %p73
      %p75 = scmp.ne.s32.totalorder %s67, %s69
      %p76 = scmp.eq.s32.totalorder %s17, 1
      %p77 = por %p75, %p76
      %p78 = scmp.ne.s32.totalorder %s69, %s70
      %p79 = scmp.eq.s32.totalorder %s17, 0
      %p80 = por %p78, %p79
      %p81 = scmp.ne.s32.totalorder %s69, %s70
      %p82 = scmp.eq.s32.totalorder %s18, 1
      %p83 = por %p81, %p82
      %p85 = scmp.ne.s32.totalorder %s70, %s84
      %p86 = scmp.eq.s32.totalorder %s18, 0
      %p87 = por %p85, %p86
      %s88 = ssub.s32 %s12, %s19
      %p89 = scmp.eq.s32.totalorder %s88, 0
      %s91 = sadd.s32 %s90, 1
      %s92 = scalar_select %p89, %s90, %s91
      %p95 = pneg %p89
      %p96 = scmp.eq.s32.totalorder %s12, 1
      %p97 = por %p95, %p96
      %p98 = scmp.ne.s32.totalorder %s90, %s93
      %p99 = scmp.eq.s32.totalorder %s12, 0
      %p100 = por %p98, %p99
      %p101 = scmp.ne.s32.totalorder %s90, %s93
      %p102 = scmp.eq.s32.totalorder %s17, 1
      %p103 = por %p101, %p102
      %p104 = scmp.ne.s32.totalorder %s93, %s94
      %p105 = scmp.eq.s32.totalorder %s17, 0
      %p106 = por %p104, %p105
      %p107 = scmp.ne.s32.totalorder %s93, %s94
      %p108 = scmp.eq.s32.totalorder %s18, 1
      %p109 = por %p107, %p108
      %p111 = scmp.ne.s32.totalorder %s94, %s110
      %p112 = scmp.eq.s32.totalorder %s18, 0
      %p113 = por %p111, %p112
      %p114 = scmp.le.s32.totalorder 1, %s12
      %p115 = scmp.lt.s32.totalorder %s12, 3
      %p116 = pnand %p114, %p115
      %p117 = pneg %p116
      // Predicated region
      $region9: #{tpu_custom_call.1} parent=5 // pred_check
        _
      $region10: #{tpu_custom_call.1} parent=5 // pred_check_branch
        %119 = sbr.rel (%p116) target = $region12
      $region11: #{tpu_custom_call.1} parent=5 // pred_region
        %s120 = ssub.s32 %s12, 1
        // Predicated region
        $region13: #{tpu_custom_call.1} parent=11 // pred_check
          %p121 = pneg %p59
        $region14: #{tpu_custom_call.1} parent=11 // pred_check_branch
          %123 = sbr.rel (%p121) target = $region16
        $region15: #{tpu_custom_call.1} parent=11 // pred_region
          _
        $region16: #{tpu_custom_call.1} parent=11 // pred_fallthru
          _
        // Predicated region
        $region17: #{tpu_custom_call.1} parent=11 // pred_check
          %p124 = pneg %p80
        $region18: #{tpu_custom_call.1} parent=11 // pred_check_branch
          %126 = sbr.rel (%p124) target = $region20
        $region19: #{tpu_custom_call.1} parent=11 // pred_region
          _
        $region20: #{tpu_custom_call.1} parent=11 // pred_fallthru
          _
      $region12: #{tpu_custom_call.1} parent=5 // pred_fallthru
        _
      %p127 = scmp.lt.s32.totalorder %s12, 2
      // Predicated region
      $region21: #{tpu_custom_call.1} parent=5 // pred_check
        %p128 = pneg %p127
      $region22: #{tpu_custom_call.1} parent=5 // pred_check_branch
        %130 = sbr.rel (%p128) target = $region24
      $region23: #{tpu_custom_call.1} parent=5 // pred_region
        // Predicated region
        $region25: #{tpu_custom_call.1} parent=23 // pred_check
          %p131 = pneg %p32
        $region26: #{tpu_custom_call.1} parent=23 // pred_check_branch
          %133 = sbr.rel (%p131) target = $region28
        $region27: #{tpu_custom_call.1} parent=23 // pred_region
          %p134 = scmp.lt.s32.totalorder %s12, 1
          %s135 = scalar_select %p134, %s12, 1
          %s136 = smul.addr %s135, 8
          %s137 = scalar_lea.vmem %s0, %s136
        $region28: #{tpu_custom_call.1} parent=23 // pred_fallthru
          _
      $region24: #{tpu_custom_call.1} parent=5 // pred_fallthru
        _
      %p138 = scmp.le.s32.totalorder 1, %s12
      %p139 = scmp.lt.s32.totalorder %s12, 3
      %p140 = pnand %p138, %p139
      %p141 = pneg %p140
      // Predicated region
      $region29: #{tpu_custom_call.1} parent=5 // pred_check
        _
      $region30: #{tpu_custom_call.1} parent=5 // pred_check_branch
        %143 = sbr.rel (%p140) target = $region32
      $region31: #{tpu_custom_call.1} parent=5 // pred_region
        %s144 = ssub.s32 %s12, 1
        %p145 = scmp.lt.s32.totalorder %s17, 1
        %s146 = scalar_select %p145, %s17, 1
        %s147 = smul.addr %s146, 8
        %s148 = scalar_lea.vmem %s0, %s147
        %p149 = pneg %p38
        %p150 = pneg %p35
        %p151 = pneg %p59
        %p152 = pneg %p56
        %p153 = pneg %p80
        %p154 = pneg %p77
        %p155 = pneg %p106
        %p156 = pneg %p103
        %s157 = sand.u32 %s93, 1
        %s158 = scalar_lea.sflag [#allocation3], %s157
        %s159 = sand.u32 %s93, 1
        %s160 = smul.addr %s159, 8
        %s161 = scalar_lea.vmem [#allocation2], %s160
        %p162 = scmp.lt.s32.totalorder %s17, 1
        %s163 = scalar_select %p162, %s17, 1
        %s164 = smul.addr %s163, 8
        %s165 = scalar_lea.vmem %s0, %s164
        %v166 = vld [vmem:[%s165] sm:$0xff]
        %v167 = vld [vmem:[%s1] sm:$0xff]
        %v168 = vld [vmem:[%s1 + $0x8] sm:$0xff]
        %v169 = vld [vmem:[%s1 + $0x10] sm:$0xff]
        %v170 = vld [vmem:[%s1 + $0x18] sm:$0xff]
        %vm171 = vcmask 261120
        %v173 = vsel %vm171, %v166, 0
        %175 = vmatprep.subr.mxu0 0.0
        %176 = vmatpush1.msra.mxu0 0.0
        %177 = vmatprep.subr.mxu0 0.0
        %178 = vmatpush1.msra.mxu0 0.0
        %179 = vmatprep.subr.mxu0 0.0
        %180 = vmatpush1.msra.mxu0 0.0
        %181 = vmatprep.subr.mxu0 0.0
        %182 = vmatpush1.msra.mxu0 0.0
        %183 = vmatprep.subr.mxu0 0.0
        %184 = vmatpush1.msra.mxu0 0.0
        %185 = vmatprep.subr.mxu0 0.0
        %186 = vmatpush1.msra.mxu0 0.0
        %187 = vmatprep.subr.mxu0 0.0
        %188 = vmatpush1.msra.mxu0 0.0
        %189 = vmatprep.subr.mxu0 0.0
        %190 = vmatpush1.msra.mxu0 0.0
        %191 = vmatprep.subr.mxu0 0.0
        %192 = vmatpush1.msra.mxu0 0.0
        %193 = vmatprep.subr.mxu0 0.0
        %194 = vmatpush1.msra.mxu0 0.0
        %195 = vmatprep.subr.mxu0 0.0
        %196 = vmatpush1.msra.mxu0 0.0
        %197 = vmatprep.subr.mxu0 0.0
        %198 = vmatpush1.msra.mxu0 0.0
        %199 = vmatprep.subr.mxu0 0.0
        %200 = vmatpush1.msra.mxu0 %v170
        %201 = vmatprep.subr.mxu0 0.0
        %202 = vmatpush1.msra.mxu0 %v169
        %203 = vmatprep.subr.mxu0 0.0
        %204 = vmatpush1.msra.mxu0 %v168
        %205 = vmatprep.subr.mxu0 0.0
        %206 = vmatpush1.msra.mxu0 %v167
        %207 = vmatprep.subr.mxu0 0.0
        %208 = vmatpush2.msra.mxu0 0.0
        %209 = vmatprep.subr.mxu0 0.0
        %210 = vmatpush2.msra.mxu0 0.0
        %211 = vmatprep.subr.mxu0 0.0
        %212 = vmatpush2.msra.mxu0 0.0
        %213 = vmatprep.subr.mxu0 0.0
        %214 = vmatpush2.msra.mxu0 0.0
        %215 = vmatprep.subr.mxu0 0.0
        %216 = vmatpush2.msra.mxu0 0.0
        %217 = vmatprep.subr.mxu0 0.0
        %218 = vmatpush2.msra.mxu0 0.0
        %219 = vmatprep.subr.mxu0 0.0
        %220 = vmatpush2.msra.mxu0 0.0
        %221 = vmatprep.subr.mxu0 0.0
        %222 = vmatpush2.msra.mxu0 0.0
        %223 = vmatprep.subr.mxu0 0.0
        %224 = vmatpush2.msra.mxu0 0.0
        %225 = vmatprep.subr.mxu0 0.0
        %226 = vmatpush2.msra.mxu0 0.0
        %227 = vmatprep.subr.mxu0 0.0
        %228 = vmatpush2.msra.mxu0 0.0
        %229 = vmatprep.subr.mxu0 0.0
        %230 = vmatpush2.msra.mxu0 0.0
        %231 = vmatprep.subr.mxu0 0.0
        %232 = vmatpush2.msra.mxu0 0.0
        %233 = vmatprep.subr.mxu0 0.0
        %234 = vmatpush2.msra.mxu0 0.0
        %235 = vmatprep.subr.mxu0 0.0
        %236 = vmatpush2.msra.mxu0 0.0
        %237 = vmatprep.subr.mxu0 0.0
        %238 = vmatpush2.msra.mxu0 0.0
        %239 = vmatprep.mubr.f32.mxu0 0.0
        %240 = vmatmul.mubr.f32.gmra.mxu0 %v173
        %v241 = vpop.f32.mrf.mxu0
        %v242 = vadd.f32 0.0, %v241
        %v243 = vpop.f32.mrf.mxu0
        %244 = vdwg.mxu0
        %v245 = vld [vmem:[%s2] sm:$0xff]
        %vm246 = vcmask 64512
        %v248 = vsel %vm246, %v242, 0
        %250 = vmatprep.subr.mxu0 0.0
        %251 = vmatpush1.msra.mxu0 0.0
        %252 = vmatprep.subr.mxu0 0.0
        %253 = vmatpush1.msra.mxu0 0.0
        %254 = vmatprep.subr.mxu0 0.0
        %255 = vmatpush1.msra.mxu0 0.0
        %256 = vmatprep.subr.mxu0 0.0
        %257 = vmatpush1.msra.mxu0 0.0
        %258 = vmatprep.subr.mxu0 0.0
        %259 = vmatpush1.msra.mxu0 0.0
        %260 = vmatprep.subr.mxu0 0.0
        %261 = vmatpush1.msra.mxu0 0.0
        %262 = vmatprep.subr.mxu0 0.0
        %263 = vmatpush1.msra.mxu0 0.0
        %264 = vmatprep.subr.mxu0 0.0
        %265 = vmatpush1.msra.mxu0 0.0
        %266 = vmatprep.subr.mxu0 0.0
        %267 = vmatpush1.msra.mxu0 0.0
        %268 = vmatprep.subr.mxu0 0.0
        %269 = vmatpush1.msra.mxu0 0.0
        %270 = vmatprep.subr.mxu0 0.0
        %271 = vmatpush1.msra.mxu0 0.0
        %272 = vmatprep.subr.mxu0 0.0
        %273 = vmatpush1.msra.mxu0 0.0
        %274 = vmatprep.subr.mxu0 0.0
        %275 = vmatpush1.msra.mxu0 0.0
        %276 = vmatprep.subr.mxu0 0.0
        %277 = vmatpush1.msra.mxu0 0.0
        %278 = vmatprep.subr.mxu0 0.0
        %279 = vmatpush1.msra.mxu0 0.0
        %280 = vmatprep.subr.mxu0 0.0
        %281 = vmatpush1.msra.mxu0 %v245
        %282 = vmatprep.subr.mxu0 0.0
        %283 = vmatpush2.msra.mxu0 0.0
        %284 = vmatprep.subr.mxu0 0.0
        %285 = vmatpush2.msra.mxu0 0.0
        %286 = vmatprep.subr.mxu0 0.0
        %287 = vmatpush2.msra.mxu0 0.0
        %288 = vmatprep.subr.mxu0 0.0
        %289 = vmatpush2.msra.mxu0 0.0
        %290 = vmatprep.subr.mxu0 0.0
        %291 = vmatpush2.msra.mxu0 0.0
        %292 = vmatprep.subr.mxu0 0.0
        %293 = vmatpush2.msra.mxu0 0.0
        %294 = vmatprep.subr.mxu0 0.0
        %295 = vmatpush2.msra.mxu0 0.0
        %296 = vmatprep.subr.mxu0 0.0
        %297 = vmatpush2.msra.mxu0 0.0
        %298 = vmatprep.subr.mxu0 0.0
        %299 = vmatpush2.msra.mxu0 0.0
        %300 = vmatprep.subr.mxu0 0.0
        %301 = vmatpush2.msra.mxu0 0.0
        %302 = vmatprep.subr.mxu0 0.0
        %303 = vmatpush2.msra.mxu0 0.0
        %304 = vmatprep.subr.mxu0 0.0
        %305 = vmatpush2.msra.mxu0 0.0
        %306 = vmatprep.subr.mxu0 0.0
        %307 = vmatpush2.msra.mxu0 0.0
        %308 = vmatprep.subr.mxu0 0.0
        %309 = vmatpush2.msra.mxu0 0.0
        %310 = vmatprep.subr.mxu0 0.0
        %311 = vmatpush2.msra.mxu0 0.0
        %312 = vmatprep.subr.mxu0 0.0
        %313 = vmatpush2.msra.mxu0 0.0
        %314 = vmatprep.mubr.f32.mxu0 0.0
        %315 = vmatmul.mubr.f32.gmra.mxu0 %v248
        %v316 = vpop.f32.mrf.mxu0
        %v317 = vadd.f32 0.0, %v316
        %v318 = vpop.f32.mrf.mxu0
        %319 = vdwg.mxu0
        %320 = vst [vmem:[%s161] sm:$0xff] %v317
        %s321 = sand.u32 %s93, 1
        %s322 = scalar_lea.sflag [#allocation3], %s321
        %s323 = sand.u32 %s93, 1
        %s324 = smul.addr %s323, 8
        %s325 = scalar_lea.vmem [#allocation2], %s324
        // Predicated region
        $region33: #{tpu_custom_call.1} parent=31 // pred_check
          %p326 = pneg %p103
        $region34: #{tpu_custom_call.1} parent=31 // pred_check_branch
          %328 = sbr.rel (%p326) target = $region36
        $region35: #{tpu_custom_call.1} parent=31 // pred_region
          %s330 = ssub.s32 128, 128
          %331 = vsyncadd %s322, %s330
          %s332 = smul.addr %s17, 128
          %s333 = scalar_lea.hbm %s3, %s332
          %s335 = sshll.u32 %s325, 4
          %s336 = int_to_ptr.vmem [resolvable:$true] %s335
          %338 = dma.vmem_to_hbm [thread:$0]  %s336, 128, %s333, %s322
        $region36: #{tpu_custom_call.1} parent=31 // pred_fallthru
          _
      $region32: #{tpu_custom_call.1} parent=5 // pred_fallthru
        _
      %p339 = scmp.le.s32.totalorder 2, %s12
      // Predicated region
      $region37: #{tpu_custom_call.1} parent=5 // pred_check
        %p340 = pneg %p339
      $region38: #{tpu_custom_call.1} parent=5 // pred_check_branch
        %342 = sbr.rel (%p340) target = $region40
      $region39: #{tpu_custom_call.1} parent=5 // pred_region
        %s343 = ssub.s32 %s12, 2
        // Predicated region
        $region41: #{tpu_custom_call.1} parent=39 // pred_check
          %p344 = pneg %p109
        $region42: #{tpu_custom_call.1} parent=39 // pred_check_branch
          %346 = sbr.rel (%p344) target = $region44
        $region43: #{tpu_custom_call.1} parent=39 // pred_region
          %s347 = sand.u32 %s94, 1
          %s348 = scalar_lea.sflag [#allocation3], %s347
          %s349 = sand.u32 %s94, 1
          %s350 = smul.addr %s349, 8
          %s351 = scalar_lea.vmem [#allocation2], %s350
          %352 = dma.done %s348, 128
        $region44: #{tpu_custom_call.1} parent=39 // pred_fallthru
          _
      $region40: #{tpu_custom_call.1} parent=5 // pred_fallthru
        _
    $region6: #{tpu_custom_call.1} parent=1 // loop_footer
      %s16 = sadd.s32 1, %s12
    $region7: #{tpu_custom_call.1} parent=1 // loop_footer_branch
      %11 = sbr.rel target = $region3
    $region8: #{tpu_custom_call.1} parent=1 // loop_exit
      _
    %353 = vsyncpa [#allocation3], 1
    %s354 = scalar_lea.sflag [#allocation3], 1
    %355 = vsyncpa %s354, 1

</llo_original>
